<compile_context>
chip_gen: v7x
topology: tpu7x:2x2x1
jax: 0.10.0
libtpu: 0.0.40
codegen_flags: <defaults>
</compile_context>

<pallas_src>
import math
import functools

import jax
import jax.numpy as jnp
from jax.experimental import pallas as pl
from jax.experimental.pallas import tpu as pltpu


# ----------------------------------------------------------------------------
# shared math helpers (used by both the kernels and the pure-JAX reference)
# ----------------------------------------------------------------------------
def _layer_norm(v, w, b, eps):
    u = jnp.mean(v, axis=-1, keepdims=True)
    s = jnp.mean(jnp.square(v - u), axis=-1, keepdims=True)
    return w * ((v - u) * jax.lax.rsqrt(s + eps)) + b


def _gelu(x):
    c = math.sqrt(2.0 / math.pi)
    return 0.5 * x * (1.0 + jnp.tanh(c * (x + 0.044715 * x * x * x)))


def _mm(x_f32, w_bf16):
    # bf16 MXU matmul with float32 accumulation.
    return jnp.dot(x_f32.astype(jnp.bfloat16), w_bf16,
                   preferred_element_type=jnp.float32)


def _pick_tile(S, target=256):
    """Largest tile <= target that divides S (multiple of 8 when possible)."""
    if S <= target:
        return S
    for t in range(target, 7, -8):
        if S % t == 0:
            return t
    return S


# ----------------------------------------------------------------------------
# feature probes (robust fallbacks keep the kernel runnable everywhere)
# ----------------------------------------------------------------------------
def _probe_copy_kernel(x_ref, o_ref):
    o_ref[...] = x_ref[...]


_WEIGHT_PIPELINE_KW = None
WEIGHT_SINGLE_BUFFERED = False   # surfaced (not silent) per the perf review


def _weight_pipeline_kwargs():
    """Single-buffer constant-index weight blocks if the runtime supports it."""
    global _WEIGHT_PIPELINE_KW, WEIGHT_SINGLE_BUFFERED
    if _WEIGHT_PIPELINE_KW is not None:
        return _WEIGHT_PIPELINE_KW
    try:
        kw = dict(pipeline_mode=pl.Buffered(1))
        fn = pl.pallas_call(
            _probe_copy_kernel,
            grid=(1,),
            in_specs=[pl.BlockSpec((8, 128), lambda i: (0, 0), **kw)],
            out_specs=pl.BlockSpec((8, 128), lambda i: (0, 0)),
            out_shape=jax.ShapeDtypeStruct((8, 128), jnp.float32),
        )
        x = jnp.arange(8 * 128, dtype=jnp.float32).reshape(8, 128)
        ok = bool(jnp.allclose(jax.block_until_ready(fn(x)), x))
        _WEIGHT_PIPELINE_KW = kw if ok else {}
        WEIGHT_SINGLE_BUFFERED = ok
    except Exception:
        _WEIGHT_PIPELINE_KW = {}
        WEIGHT_SINGLE_BUFFERED = False
    return _WEIGHT_PIPELINE_KW


_VMEM_LIMIT = "unset"


def _vmem_limit_bytes():
    """~100 MiB on 128-MiB parts (v5e/v6e); capacity minus headroom on v7x."""
    global _VMEM_LIMIT
    if _VMEM_LIMIT == "unset":
        try:
            cap = pltpu.get_tpu_info().vmem_capacity_bytes
            _VMEM_LIMIT = int(max(min(cap - 12 * (1 << 20), 100 * (1 << 20)),
                                  32 * (1 << 20)))
        except Exception:
            _VMEM_LIMIT = None           # fall back to compiler default
    return _VMEM_LIMIT


# ----------------------------------------------------------------------------
# Pass 1: LN1 + fused qkv projection; emits q and the bf16 present K|V slab
# ----------------------------------------------------------------------------
def qkv_present_kernel(x_ref, ln1w_ref, ln1b_ref, wqkv_ref, bqkv_ref,
                       q_ref, kv_ref, *, ln_eps):
    x = x_ref[0]                                       # (tq, E) f32
    E = x.shape[-1]
    h = _layer_norm(x, ln1w_ref[0], ln1b_ref[0], ln_eps)
    qkv = _mm(h, wqkv_ref[...]) + bqkv_ref[0]          # (tq, 3E) f32
    # q and the lane-dense "present" K|V slab are written back in bfloat16:
    # halves HBM writeback, and the attention pass consumes bf16 anyway.
    q_ref[0] = qkv[:, :E].astype(jnp.bfloat16)
    kv_ref[0] = qkv[:, E:].astype(jnp.bfloat16)


# ----------------------------------------------------------------------------
# Pass 2: flash-style attention over KV tiles + out-proj + MLP (+ fused ln_f)
# ----------------------------------------------------------------------------
def attn_mlp_kernel(x_ref, q_ref, kv_ref,
                    wo_ref, bo_ref, ln2w_ref, ln2b_ref,
                    wfc_ref, bfc_ref, wpr_ref, bpr_ref,
                    *rest,
                    n_head, head_dim, q_tile, kv_tile,
                    ln_eps, final_ln, final_ln_eps):
    if final_ln:
        lnfw_ref, lnfb_ref, out_ref, m_sc, l_sc, acc_sc = rest
    else:
        out_ref, m_sc, l_sc, acc_sc = rest
        lnfw_ref = lnfb_ref = None

    x = x_ref[0]                                       # (tq, E) f32 residual
    tq, E = x.shape
    H, D = n_head, head_dim
    qi = pl.program_id(1)

    # per-tile head split (small relayout; no full-S transposes)
    qh = jnp.transpose(q_ref[0].reshape(tq, H, D), (1, 0, 2))     # (H,tq,D) bf16

    # online-softmax state lives in VMEM scratch (bounded live ranges)
    m_sc[...] = jnp.full_like(m_sc, -jnp.inf)
    l_sc[...] = jnp.zeros_like(l_sc)
    acc_sc[...] = jnp.zeros_like(acc_sc)

    scale = jnp.float32(1.0 / math.sqrt(D))
    q_pos = qi * q_tile + jax.lax.broadcasted_iota(jnp.int32, (tq, kv_tile), 0)

    # causal tile skipping: only KV tiles intersecting [0, (qi+1)*tq) are read
    n_kv = ((qi + 1) * q_tile + kv_tile - 1) // kv_tile

    def kv_step(step, carry):
        kv_start = pl.multiple_of(step * kv_tile, kv_tile)
        kv_t = kv_ref[pl.ds(kv_start, kv_tile), :]                # (tk, 2E) bf16
        kh = jnp.transpose(kv_t[:, :E].reshape(kv_tile, H, D), (1, 0, 2))
        vh = jnp.transpose(kv_t[:, E:].reshape(kv_tile, H, D), (1, 0, 2))

        s = jnp.einsum("hqd,hkd->hqk", qh, kh,
                       preferred_element_type=jnp.float32) * scale  # (H,tq,tk)
        kv_pos = kv_start + jax.lax.broadcasted_iota(
            jnp.int32, (tq, kv_tile), 1)
        s = jnp.where((kv_pos <= q_pos)[None], s, jnp.float32(-1e10))

        m_prev = m_sc[...]
        m_new = jnp.maximum(m_prev, s.max(axis=-1, keepdims=True))
        alpha = jnp.exp(m_prev - m_new)
        # TODO(synk): on v6e/v7x exp/p could run in bf16 (bf16 EUP/VPU); kept
        # f32 so the same kernel stays exact on v5e.
        p = jnp.exp(s - m_new)
        l_sc[...] = alpha * l_sc[...] + p.sum(axis=-1, keepdims=True)
        acc_sc[...] = alpha * acc_sc[...] + jnp.einsum(
            "hqk,hkd->hqd", p.astype(jnp.bfloat16), vh,
            preferred_element_type=jnp.float32)
        m_sc[...] = m_new
        return carry

    jax.lax.fori_loop(0, n_kv, kv_step, None)

    a = acc_sc[...] * pl.reciprocal(l_sc[...], approx=True)        # (H,tq,D)
    a = jnp.transpose(a, (1, 0, 2)).reshape(tq, E)                  # merge heads
    a = _mm(a, wo_ref[...]) + bo_ref[0]
    x1 = x + a                          # dropout == identity (inference)

    h2 = _layer_norm(x1, ln2w_ref[0], ln2b_ref[0], ln_eps)
    f = _gelu(_mm(h2, wfc_ref[...]) + bfc_ref[0])                   # (tq, 4E)
    y = x1 + _mm(f, wpr_ref[...]) + bpr_ref[0]

    if final_ln:
        y = _layer_norm(y, lnfw_ref[0], lnfb_ref[0], final_ln_eps)
    out_ref[0] = y


# ----------------------------------------------------------------------------
# Wrapper around the two pallas_calls for one Block
# ----------------------------------------------------------------------------
def run_block(x, p, lnf_w, lnf_b, *, n_head, ln_eps=1e-8,
              final_ln=False, final_ln_eps=1e-8):
    B, S, E = x.shape
    D = E // n_head
    n_state = p["wfc"].shape[1]
    wkw = _weight_pipeline_kwargs()
    vmem = _vmem_limit_bytes()

    tq = _pick_tile(S)      # >=256 at real GPT-2 sizes; == S for small S
    tk = _pick_tile(S)
    assert S % tq == 0 and S % tk == 0

    def w_spec(shape):
        nd = len(shape)
        return pl.BlockSpec(shape, lambda *_: (0,) * nd, **wkw)

    cp = pltpu.CompilerParams(
        dimension_semantics=("parallel", "parallel"),
        vmem_limit_bytes=vmem)

    # ---- pass 1: LN1 + fused qkv projection ---------------------------------
    q_bf, kv_bf = pl.pallas_call(
        functools.partial(qkv_present_kernel, ln_eps=ln_eps),
        grid=(B, S // tq),
        in_specs=[
            pl.BlockSpec((1, tq, E), lambda b, i: (b, i, 0)),      # hidden tile
            w_spec((1, E)), w_spec((1, E)),                        # ln_1 w, b
            w_spec((E, 3 * E)), w_spec((1, 3 * E)),                # c_attn w, b
        ],
        out_specs=(
            pl.BlockSpec((1, tq, E), lambda b, i: (b, i, 0)),      # q (bf16)
            pl.BlockSpec((1, tq, 2 * E), lambda b, i: (b, i, 0)),  # K|V slab
        ),
        out_shape=(
            jax.ShapeDtypeStruct((B, S, E), jnp.bfloat16),
            jax.ShapeDtypeStruct((B, S, 2 * E), jnp.bfloat16),
        ),
        compiler_params=cp,
    )(x, p["ln1_w"], p["ln1_b"], p["wqkv"], p["bqkv"])

    # ---- pass 2: flash attention + out-proj + MLP (+ ln_f on last layer) -----
    in_specs = [
        pl.BlockSpec((1, tq, E), lambda b, i: (b, i, 0)),          # residual x
        pl.BlockSpec((1, tq, E), lambda b, i: (b, i, 0)),          # q tile bf16
        pl.BlockSpec((None, S, 2 * E), lambda b, i: (b, 0, 0)),    # full K|V slab
        w_spec((E, E)), w_spec((1, E)),                            # attn c_proj
        w_spec((1, E)), w_spec((1, E)),                            # ln_2
        w_spec((E, n_state)), w_spec((1, n_state)),                # mlp c_fc
        w_spec((n_state, E)), w_spec((1, E)),                      # mlp c_proj
    ]
    args = [x, q_bf, kv_bf,
            p["wo"], p["bo"], p["ln2_w"], p["ln2_b"],
            p["wfc"], p["bfc"], p["wpr"], p["bpr"]]
    if final_ln:                     # ln_f weights only DMA'd for the last layer
        in_specs += [w_spec((1, E)), w_spec((1, E))]
        args += [lnf_w, lnf_b]

    kernel = functools.partial(
        attn_mlp_kernel, n_head=n_head, head_dim=D, q_tile=tq, kv_tile=tk,
        ln_eps=ln_eps, final_ln=final_ln, final_ln_eps=final_ln_eps)

    x_out = pl.pallas_call(
        kernel,
        grid=(B, S // tq),
        in_specs=in_specs,
        out_specs=pl.BlockSpec((1, tq, E), lambda b, i: (b, i, 0)),
        out_shape=jax.ShapeDtypeStruct((B, S, E), jnp.float32),
        scratch_shapes=[
            pltpu.VMEM((n_head, tq, 1), jnp.float32),   # m (online softmax max)
            pltpu.VMEM((n_head, tq, 1), jnp.float32),   # l (denominator)
            pltpu.VMEM((n_head, tq, D), jnp.float32),   # acc
        ],
        compiler_params=cp,
    )(*args)

    # present == torch.stack((key.transpose(-2,-1), value)) -> (2, B, H, S, D).
    # kv_bf[..., :E] holds keys in (S, h*D+d) order (== torch's transposed key),
    # kv_bf[..., E:] holds values; the cheap reshape/transpose stays in XLA so
    # the kernel's stores remain lane-dense.  Presents are bf16 (review item).
    present = jnp.transpose(kv_bf.reshape(B, S, 2, n_head, D), (2, 0, 3, 1, 4))
    return x_out, present


# ----------------------------------------------------------------------------
# Parameter init + full model forward
# ----------------------------------------------------------------------------
def init_params(key, *, vocab_size, n_positions, n_layer, n_embd):
    n_state = 4 * n_embd
    keys = jax.random.split(key, 2 + 8 * n_layer)
    ki = iter(keys)
    std = 0.02

    def w(shape):   # projection weights stored bf16 (streamed to MXU)
        return (jax.random.normal(next(ki), shape, jnp.float32) * std).astype(jnp.bfloat16)

    def b(shape):   # biases / LN params stay f32
        return jax.random.normal(next(ki), shape, jnp.float32) * std

    params = {
        "wte": jax.random.normal(next(ki), (vocab_size, n_embd), jnp.float32) * std,
        "wpe": jax.random.normal(next(ki), (n_positions, n_embd), jnp.float32) * std,
        "ln_f_w": jnp.ones((1, n_embd), jnp.float32),
        "ln_f_b": jnp.zeros((1, n_embd), jnp.float32),
        "blocks": [],
    }
    for _ in range(n_layer):
        params["blocks"].append({
            "ln1_w": jnp.ones((1, n_embd), jnp.float32),
            "ln1_b": jnp.zeros((1, n_embd), jnp.float32),
            "wqkv": w((n_embd, 3 * n_embd)), "bqkv": b((1, 3 * n_embd)),
            "wo":   w((n_embd, n_embd)),     "bo":   b((1, n_embd)),
            "ln2_w": jnp.ones((1, n_embd), jnp.float32),
            "ln2_b": jnp.zeros((1, n_embd), jnp.float32),
            "wfc":  w((n_embd, n_state)),    "bfc":  b((1, n_state)),
            "wpr":  w((n_state, n_embd)),    "bpr":  b((1, n_embd)),
        })
    return params


def gpt2_forward(params, input_ids, *, n_head, eps=1e-8):
    # past is None -> past_length = 0 (the torch module's default path)
    B, S = input_ids.shape
    pos = jnp.arange(S, dtype=jnp.int32)

    hidden = (jnp.take(params["wte"], input_ids, axis=0)
              + jnp.take(params["wpe"], pos, axis=0)[None, :, :]).astype(jnp.float32)

    n_layer = len(params["blocks"])
    presents = []
    for li, blk in enumerate(params["blocks"]):
        hidden, present = run_block(
            hidden, blk, params["ln_f_w"], params["ln_f_b"],
            n_head=n_head,
            ln_eps=1e-8,                   # torch Block hard-codes LayerNorm eps=1e-8
            final_ln=(li == n_layer - 1),  # fuse ln_f into the last block's kernel
            final_ln_eps=eps)
        presents.append(present)
    return hidden, presents


# ----------------------------------------------------------------------------
# Pure-JAX reference (mirrors the kernels' mixed-precision policy so the check
# isolates kernel correctness from the bf16 quantization choice)
# ----------------------------------------------------------------------------
def ref_forward(params, input_ids, *, n_head, eps=1e-8):
    B, S = input_ids.shape
    pos = jnp.arange(S, dtype=jnp.int32)
    h = (jnp.take(params["wte"], input_ids, axis=0)
         + jnp.take(params["wpe"], pos, axis=0)[None, :, :]).astype(jnp.float32)
    E = h.shape[-1]
    D = E // n_head
    row = jax.lax.broadcasted_iota(jnp.int32, (S, S), 0)
    col = jax.lax.broadcasted_iota(jnp.int32, (S, S), 1)
    causal = col <= row

    presents = []
    for blk in params["blocks"]:
        hn = _layer_norm(h, blk["ln1_w"][0], blk["ln1_b"][0], 1e-8)
        qkv = _mm(hn, blk["wqkv"]) + blk["bqkv"][0]
        q, k, v = jnp.split(qkv, 3, axis=-1)
        qb, kb, vb = (t.astype(jnp.bfloat16) for t in (q, k, v))
        kh = jnp.transpose(kb.reshape(B, S, n_head, D), (0, 2, 1, 3))
        vh = jnp.transpose(vb.reshape(B, S, n_head, D), (0, 2, 1, 3))
        presents.append(jnp.stack([kh, vh], axis=0))          # (2, B, H, S, D) bf16
        qh = jnp.transpose(qb.reshape(B, S, n_head, D), (0, 2, 1, 3))
        w = jnp.einsum("bhqd,bhkd->bhqk", qh, kh,
                       preferred_element_type=jnp.float32) * (1.0 / math.sqrt(D))
        w = jnp.where(causal[None, None], w, jnp.float32(-1e10))
        w = w - jnp.max(w, axis=-1, keepdims=True)
        pr = jnp.exp(w)
        pr = pr / jnp.sum(pr, axis=-1, keepdims=True)
        a = jnp.einsum("bhqk,bhkd->bhqd", pr.astype(jnp.bfloat16), vh,
                       preferred_element_type=jnp.float32)
        a = jnp.transpose(a, (0, 2, 1, 3)).reshape(B, S, E)
        a = _mm(a, blk["wo"]) + blk["bo"][0]
        h = h + a
        hn = _layer_norm(h, blk["ln2_w"][0], blk["ln2_b"][0], 1e-8)
        f = _gelu(_mm(hn, blk["wfc"]) + blk["bfc"][0])
        h = h + _mm(f, blk["wpr"]) + blk["bpr"][0]
    h = _layer_norm(h, params["ln_f_w"][0], params["ln_f_b"][0], eps)
    return h, presents


# ----------------------------------------------------------------------------
if __name__ == "__main__":
    # small config consistent with the module (head_dim=64 as in real GPT-2)
    vocab_size = 50
    n_positions = 16
    n_layer = 2
    n_embd = 128
    n_head = 2
    B, S = 2, 16

    key = jax.random.PRNGKey(0)
    pkey, ikey = jax.random.split(key)
    params = init_params(pkey, vocab_size=vocab_size, n_positions=n_positions,
                         n_layer=n_layer, n_embd=n_embd)
    input_ids = jax.random.randint(ikey, (B, S), 0, vocab_size, dtype=jnp.int32)

    hidden, presents = gpt2_forward(params, input_ids, n_head=n_head, eps=1e-8)
    hidden = jax.block_until_ready(hidden)
    presents = [jax.block_until_ready(p) for p in presents]

    ref_hidden, ref_presents = ref_forward(params, input_ids, n_head=n_head, eps=1e-8)

    D = n_embd // n_head
    assert hidden.shape == (B, S, n_embd)
    assert all(p.shape == (2, B, n_head, S, D) for p in presents)
    assert jnp.allclose(hidden, ref_hidden, rtol=3e-2, atol=3e-2), \
        "hidden mismatch vs reference"
    for p_k, p_r in zip(presents, ref_presents):
        assert jnp.allclose(p_k.astype(jnp.float32), p_r.astype(jnp.float32),
                            rtol=2e-2, atol=2e-2), \
            "present K/V mismatch vs reference"

    print("KERNEL_OK")
</pallas_src>

<mosaic_0001>
module attributes {stable_mosaic.version = 11 : i64} {
  func.func @_probe_copy_kernel(%arg0: i32, %arg1: memref<8x128xf32, #tpu.memory_space<vmem>>, %arg2: memref<8x128xf32, #tpu.memory_space<vmem>>) attributes {dimension_semantics = [#tpu.dimension_semantics<arbitrary>], iteration_bounds = array<i64: 1>, scalar_prefetch = 0 : i64, scratch_operands = 0 : i64, tpu.core_type = #tpu.core_type<tc>, window_params = [{pipeline_mode = #tpu.pipeline_mode<synchronous>, transform_indices = @transform_0, window_bounds = array<i64: 8, 128>}, {pipeline_mode = #tpu.pipeline_mode<synchronous>, transform_indices = @transform_1, window_bounds = array<i64: 8, 128>}]} {
    %c0 = arith.constant 0 : index
    %c0_0 = arith.constant 0 : index
    %0 = vector.load %arg1[%c0, %c0_0] : memref<8x128xf32, #tpu.memory_space<vmem>>, vector<8x128xf32>
    %c0_1 = arith.constant 0 : index
    %c0_2 = arith.constant 0 : index
    %1 = vector.load %arg2[%c0_1, %c0_2] : memref<8x128xf32, #tpu.memory_space<vmem>>, vector<8x128xf32>
    tpu.vector_store %arg2[%c0_1, %c0_2], %0 {strides = array<i32>} : memref<8x128xf32, #tpu.memory_space<vmem>>, vector<8x128xf32>,
    return
  }
  func.func @transform_0(%arg0: i32) -> (i32, i32) {
    %c0_i32 = arith.constant 0 : i32
    %c0_i32_0 = arith.constant 0 : i32
    %c0_i32_1 = arith.constant 0 : i32
    return %c0_i32, %c0_i32_0 : i32, i32
  }
  func.func @transform_1(%arg0: i32) -> (i32, i32) {
    %c0_i32 = arith.constant 0 : i32
    %c0_i32_0 = arith.constant 0 : i32
    %c0_i32_1 = arith.constant 0 : i32
    return %c0_i32, %c0_i32_0 : i32, i32
  }
}

module attributes {stable_mosaic.version = 11 : i64} {
  func.func @qkv_present_kernel(%arg0: i32, %arg1: i32, %arg2: memref<1x16x128xf32, #tpu.memory_space<vmem>>, %arg3: memref<1x128xf32, #tpu.memory_space<vmem>>, %arg4: memref<1x128xf32, #tpu.memory_space<vmem>>, %arg5: memref<128x384xbf16, #tpu.memory_space<vmem>>, %arg6: memref<1x384xf32, #tpu.memory_space<vmem>>, %arg7: memref<1x16x128xbf16, #tpu.memory_space<vmem>>, %arg8: memref<1x16x256xbf16, #tpu.memory_space<vmem>>) attributes {dimension_semantics = [#tpu.dimension_semantics<parallel>, #tpu.dimension_semantics<parallel>], iteration_bounds = array<i64: 2, 1>, scalar_prefetch = 0 : i64, scratch_operands = 0 : i64, tpu.core_type = #tpu.core_type<tc>, window_params = [{transform_indices = @transform_0, window_bounds = array<i64: 1, 16, 128>}, {pipeline_mode = #tpu.pipeline_mode<synchronous>, transform_indices = @transform_1, window_bounds = array<i64: 1, 128>}, {pipeline_mode = #tpu.pipeline_mode<synchronous>, transform_indices = @transform_2, window_bounds = array<i64: 1, 128>}, {pipeline_mode = #tpu.pipeline_mode<synchronous>, transform_indices = @transform_3, window_bounds = array<i64: 128, 384>}, {pipeline_mode = #tpu.pipeline_mode<synchronous>, transform_indices = @transform_4, window_bounds = array<i64: 1, 384>}, {transform_indices = @transform_5, window_bounds = array<i64: 1, 16, 128>}, {transform_indices = @transform_6, window_bounds = array<i64: 1, 16, 256>}]} {
    %c0 = arith.constant 0 : index
    %c0_0 = arith.constant 0 : index
    %c0_1 = arith.constant 0 : index
    %0 = vector.load %arg2[%c0, %c0_0, %c0_1] : memref<1x16x128xf32, #tpu.memory_space<vmem>>, vector<1x16x128xf32>
    %1 = vector.shape_cast %0 : vector<1x16x128xf32> to vector<16x128xf32>
    %c0_2 = arith.constant 0 : index
    %c0_3 = arith.constant 0 : index
    %2 = vector.load %arg3[%c0_2, %c0_3] : memref<1x128xf32, #tpu.memory_space<vmem>>, vector<1x128xf32>
    %3 = vector.shape_cast %2 : vector<1x128xf32> to vector<128xf32>
    %c0_4 = arith.constant 0 : index
    %c0_5 = arith.constant 0 : index
    %4 = vector.load %arg4[%c0_4, %c0_5] : memref<1x128xf32, #tpu.memory_space<vmem>>, vector<1x128xf32>
    %5 = vector.shape_cast %4 : vector<1x128xf32> to vector<128xf32>
    %cst = arith.constant dense<0.000000e+00> : vector<16xf32>
    %6 = vector.multi_reduction <add>, %1, %cst [1] : vector<16x128xf32> to vector<16xf32>
    %7 = vector.shape_cast %6 : vector<16xf32> to vector<16x1xf32>
    %cst_6 = arith.constant 1.280000e+02 : f32
    %8 = vector.broadcast %cst_6 : f32 to vector<16x1xf32>
    %9 = arith.divf %7, %8 : vector<16x1xf32>
    %10 = vector.broadcast %9 : vector<16x1xf32> to vector<16x128xf32>
    %11 = arith.subf %1, %10 : vector<16x128xf32>
    %12 = arith.mulf %11, %11 : vector<16x128xf32>
    %cst_7 = arith.constant dense<0.000000e+00> : vector<16xf32>
    %13 = vector.multi_reduction <add>, %12, %cst_7 [1] : vector<16x128xf32> to vector<16xf32>
    %14 = vector.shape_cast %13 : vector<16xf32> to vector<16x1xf32>
    %cst_8 = arith.constant 1.280000e+02 : f32
    %15 = vector.broadcast %cst_8 : f32 to vector<16x1xf32>
    %16 = arith.divf %14, %15 : vector<16x1xf32>
    %17 = vector.broadcast %9 : vector<16x1xf32> to vector<16x128xf32>
    %18 = arith.subf %1, %17 : vector<16x128xf32>
    %cst_9 = arith.constant 9.99999993E-9 : f32
    %19 = vector.broadcast %cst_9 : f32 to vector<16x1xf32>
    %20 = arith.addf %16, %19 : vector<16x1xf32>
    %21 = math.rsqrt %20 : vector<16x1xf32>
    %22 = vector.broadcast %21 : vector<16x1xf32> to vector<16x128xf32>
    %23 = arith.mulf %18, %22 : vector<16x128xf32>
    %24 = vector.shape_cast %3 : vector<128xf32> to vector<1x128xf32>
    %25 = vector.broadcast %24 : vector<1x128xf32> to vector<16x128xf32>
    %26 = arith.mulf %25, %23 : vector<16x128xf32>
    %27 = vector.shape_cast %5 : vector<128xf32> to vector<1x128xf32>
    %28 = vector.broadcast %27 : vector<1x128xf32> to vector<16x128xf32>
    %29 = arith.addf %26, %28 : vector<16x128xf32>
    %c0_10 = arith.constant 0 : index
    %c0_11 = arith.constant 0 : index
    %30 = vector.load %arg5[%c0_10, %c0_11] : memref<128x384xbf16, #tpu.memory_space<vmem>>, vector<128x384xbf16>
    %31 = arith.truncf %29 : vector<16x128xf32> to vector<16x128xbf16>
    %cst_12 = arith.constant dense<0.000000e+00> : vector<16x384xf32>
    %32 = tpu.matmul %31, %30, %cst_12 {dimension_numbers = #tpu.dot_dimension_numbers<[1], [0], [0], [1], [0, 0, 1, 1], [], []>} : vector<16x128xbf16>, vector<128x384xbf16>, vector<16x384xf32> -> vector<16x384xf32>
    %c0_13 = arith.constant 0 : index
    %c0_14 = arith.constant 0 : index
    %33 = vector.load %arg6[%c0_13, %c0_14] : memref<1x384xf32, #tpu.memory_space<vmem>>, vector<1x384xf32>
    %34 = vector.shape_cast %33 : vector<1x384xf32> to vector<384xf32>
    %35 = vector.shape_cast %34 : vector<384xf32> to vector<1x384xf32>
    %36 = vector.broadcast %35 : vector<1x384xf32> to vector<16x384xf32>
    %37 = arith.addf %32, %36 : vector<16x384xf32>
    %38 = vector.extract_strided_slice %37 {offsets = [0, 0], sizes = [16, 128], strides = [1, 1]} : vector<16x384xf32> to vector<16x128xf32>
    %39 = arith.truncf %38 : vector<16x128xf32> to vector<16x128xbf16>
    %c0_15 = arith.constant 0 : index
    %c0_16 = arith.constant 0 : index
    %c0_17 = arith.constant 0 : index
    %40 = vector.load %arg7[%c0_15, %c0_16, %c0_17] : memref<1x16x128xbf16, #tpu.memory_space<vmem>>, vector<1x16x128xbf16>
    %41 = vector.shape_cast %40 : vector<1x16x128xbf16> to vector<16x128xbf16>
    %42 = vector.shape_cast %39 : vector<16x128xbf16> to vector<1x16x128xbf16>
    tpu.vector_store %arg7[%c0_15, %c0_16, %c0_17], %42 {strides = array<i32>} : memref<1x16x128xbf16, #tpu.memory_space<vmem>>, vector<1x16x128xbf16>,
    %43 = vector.extract_strided_slice %37 {offsets = [0, 128], sizes = [16, 256], strides = [1, 1]} : vector<16x384xf32> to vector<16x256xf32>
    %44 = arith.truncf %43 : vector<16x256xf32> to vector<16x256xbf16>
    %c0_18 = arith.constant 0 : index
    %c0_19 = arith.constant 0 : index
    %c0_20 = arith.constant 0 : index
    %45 = vector.load %arg8[%c0_18, %c0_19, %c0_20] : memref<1x16x256xbf16, #tpu.memory_space<vmem>>, vector<1x16x256xbf16>
    %46 = vector.shape_cast %45 : vector<1x16x256xbf16> to vector<16x256xbf16>
    %47 = vector.shape_cast %44 : vector<16x256xbf16> to vector<1x16x256xbf16>
    tpu.vector_store %arg8[%c0_18, %c0_19, %c0_20], %47 {strides = array<i32>} : memref<1x16x256xbf16, #tpu.memory_space<vmem>>, vector<1x16x256xbf16>,
    return
  }
  func.func @transform_0(%arg0: i32, %arg1: i32) -> (i32, i32, i32) {
    %c0_i32 = arith.constant 0 : i32
    %c0_i32_0 = arith.constant 0 : i32
    return %arg0, %arg1, %c0_i32 : i32, i32, i32
  }
  func.func @transform_1(%arg0: i32, %arg1: i32) -> (i32, i32) {
    %c0_i32 = arith.constant 0 : i32
    %c0_i32_0 = arith.constant 0 : i32
    %c0_i32_1 = arith.constant 0 : i32
    return %c0_i32, %c0_i32_0 : i32, i32
  }
  func.func @transform_2(%arg0: i32, %arg1: i32) -> (i32, i32) {
    %c0_i32 = arith.constant 0 : i32
    %c0_i32_0 = arith.constant 0 : i32
    %c0_i32_1 = arith.constant 0 : i32
    return %c0_i32, %c0_i32_0 : i32, i32
  }
  func.func @transform_3(%arg0: i32, %arg1: i32) -> (i32, i32) {
    %c0_i32 = arith.constant 0 : i32
    %c0_i32_0 = arith.constant 0 : i32
    %c0_i32_1 = arith.constant 0 : i32
    return %c0_i32, %c0_i32_0 : i32, i32
  }
  func.func @transform_4(%arg0: i32, %arg1: i32) -> (i32, i32) {
    %c0_i32 = arith.constant 0 : i32
    %c0_i32_0 = arith.constant 0 : i32
    %c0_i32_1 = arith.constant 0 : i32
    return %c0_i32, %c0_i32_0 : i32, i32
  }
  func.func @transform_5(%arg0: i32, %arg1: i32) -> (i32, i32, i32) {
    %c0_i32 = arith.constant 0 : i32
    %c0_i32_0 = arith.constant 0 : i32
    return %arg0, %arg1, %c0_i32 : i32, i32, i32
  }
  func.func @transform_6(%arg0: i32, %arg1: i32) -> (i32, i32, i32) {
    %c0_i32 = arith.constant 0 : i32
    %c0_i32_0 = arith.constant 0 : i32
    return %arg0, %arg1, %c0_i32 : i32, i32, i32
  }
}

</mosaic_0001>

<llo_original>
// kernel: tpu_custom_call.1
$region0: #{tpu_custom_call.1}
  #allocation0 [shape = 'u32[]', space=smem, size = 0x4, offset = 0x4, fixed_abs, tag = 'smem constant byte address 0x4 - core index']
  #allocation1 [shape = 'u32[144,128]{1,0:T(1,128)}', space=vmem, size = 0x12000, scoped, tag = 'internal scratch']
  %s0 = inlined_call_operand.hbm [shape: f32[8,128], index: 0, kind: input, shape index: {}]
  %s1 = inlined_call_operand.hbm [shape: f32[8,128], index: 1, kind: output, shape index: {}]
  %s2 = sld [smem:[#allocation0]]
  $region18: #{tpu_custom_call.1} parent=0
    _
  %s4 = ssub.s32 1, %s2
  %s5 = scalar_select 0, %s4, %s2
  $region1: #{tpu_custom_call.1} parent=0
    #allocation2 [shape = 'u8[4096]{0}', space=vmem, size = 0x1000, scoped, tag = 'input window, operand 0, single buffered']
    #allocation3 [shape = 's32[1]{0}', space=sflag, size = 0x4, scoped, tag = 'scoped memory for tpu_custom_call.1']
    #allocation4 [shape = 's32[1]{0}', space=sflag, size = 0x4, scoped, tag = 'scoped memory for tpu_custom_call.1']
    #allocation5 [shape = 'u8[4096]{0}', space=vmem, size = 0x1000, scoped, tag = 'output window, operand 0, single buffered']
    %6 = vsyncpa [#allocation3], 0
    %7 = vsyncpa [#allocation4], 0
    // Predicated region
    $region2: #{tpu_custom_call.1} parent=1 // pred_check
      _
    $region3: #{tpu_custom_call.1} parent=1 // pred_check_branch
      %9 = sbr.rel (0) target = $region5
    $region4: #{tpu_custom_call.1} parent=1 // pred_region
      %s11 = ssub.s32 128, 128
      %12 = vsyncadd [#allocation3], %s11
      %s14 = sshll.u32 [#allocation2], 4
      %s15 = int_to_ptr.vmem [resolvable:$true] %s14
      %17 = dma.hbm_to_vmem [thread:$0]  %s0, 128, %s15, [#allocation3]
    $region5: #{tpu_custom_call.1} parent=1 // pred_fallthru
      _
    // Predicated region
    $region6: #{tpu_custom_call.1} parent=1 // pred_check
      _
    $region7: #{tpu_custom_call.1} parent=1 // pred_check_branch
      %19 = sbr.rel (0) target = $region9
    $region8: #{tpu_custom_call.1} parent=1 // pred_region
      %20 = dma.done [#allocation3], 128
    $region9: #{tpu_custom_call.1} parent=1 // pred_fallthru
      _
    %v21 = vld [vmem:[#allocation2] sm:$0xff]
    %22 = vst [vmem:[#allocation5] sm:$0xff] %v21
    // Predicated region
    $region10: #{tpu_custom_call.1} parent=1 // pred_check
      _
    $region11: #{tpu_custom_call.1} parent=1 // pred_check_branch
      %24 = sbr.rel (0) target = $region13
    $region12: #{tpu_custom_call.1} parent=1 // pred_region
      %s26 = ssub.s32 128, 128
      %27 = vsyncadd [#allocation4], %s26
      %s29 = sshll.u32 [#allocation5], 4
      %s30 = int_to_ptr.vmem [resolvable:$true] %s29
      %32 = dma.vmem_to_hbm [thread:$0]  %s30, 128, %s1, [#allocation4]
    $region13: #{tpu_custom_call.1} parent=1 // pred_fallthru
      _
    // Predicated region
    $region14: #{tpu_custom_call.1} parent=1 // pred_check
      _
    $region15: #{tpu_custom_call.1} parent=1 // pred_check_branch
      %34 = sbr.rel (0) target = $region17
    $region16: #{tpu_custom_call.1} parent=1 // pred_region
      %35 = dma.done [#allocation4], 128
    $region17: #{tpu_custom_call.1} parent=1 // pred_fallthru
      _
    %36 = vsyncpa [#allocation3], 1
    %37 = vsyncpa [#allocation4], 1

// kernel: tpu_custom_call.1
$region0: #{tpu_custom_call.1}
  #allocation0 [shape = 'u32[]', space=smem, size = 0x4, offset = 0x4, fixed_abs, tag = 'smem constant byte address 0x4 - core index']
  #allocation1 [shape = 'u32[144,128]{1,0:T(1,128)}', space=vmem, size = 0x12000, scoped, tag = 'internal scratch']
  %s0 = inlined_call_operand.hbm [shape: f32[2,16,128], index: 0, kind: input, shape index: {}]
  %s1 = inlined_call_operand.vmem [shape: f32[1,128], index: 1, kind: input, shape index: {}]
  %s2 = inlined_call_operand.vmem [shape: f32[1,128], index: 2, kind: input, shape index: {}]
  %s3 = inlined_call_operand.hbm [shape: bf16[128,384], index: 3, kind: input, shape index: {}]
  %s4 = inlined_call_operand.vmem [shape: f32[1,384], index: 4, kind: input, shape index: {}]
  %s5 = inlined_call_operand.hbm [shape: bf16[2,16,128], index: 5, kind: output, shape index: {0}]
  %s6 = inlined_call_operand.hbm [shape: bf16[2,16,256], index: 6, kind: output, shape index: {1}]
  %7 = xla_tuple %s5, %s6
  %s8 = sld [smem:[#allocation0]]
  $region69: #{tpu_custom_call.1} parent=0
    _
  %s10 = ssub.s32 1, %s8
  %s11 = scalar_select 0, %s10, %s8
  $region1: #{tpu_custom_call.1} parent=0
    #allocation2 [shape = 'u8[16384]{0}', space=vmem, size = 0x4000, scoped, tag = 'input window, operand 0']
    #allocation3 [shape = 's32[2]{0}', space=sflag, size = 0x8, scoped, tag = 'scoped memory for tpu_custom_call.1']
    #allocation4 [shape = 's32[2]{0}', space=sflag, size = 0x8, scoped, tag = 'scoped memory for tpu_custom_call.1']
    #allocation5 [shape = 'u8[98304]{0}', space=vmem, size = 0x18000, scoped, tag = 'input window, operand 3, single buffered']
    #allocation6 [shape = 's32[1]{0}', space=sflag, size = 0x4, scoped, tag = 'scoped memory for tpu_custom_call.1']
    #allocation7 [shape = 'u8[8192]{0}', space=vmem, size = 0x2000, scoped, tag = 'output window, operand 0']
    #allocation8 [shape = 'u8[16384]{0}', space=vmem, size = 0x4000, scoped, tag = 'output window, operand 1']
    #allocation9 [shape = 's32[2]{0}', space=sflag, size = 0x8, scoped, tag = 'scoped memory for tpu_custom_call.1']
    %12 = vsyncpa [#allocation3], 0
    %s13 = scalar_lea.sflag [#allocation3], 1
    %14 = vsyncpa %s13, 0
    %15 = vsyncpa [#allocation6], 0
    %16 = vsyncpa [#allocation4], 0
    %s17 = scalar_lea.sflag [#allocation4], 1
    %18 = vsyncpa %s17, 0
    %19 = vsyncpa [#allocation9], 0
    %s20 = scalar_lea.sflag [#allocation9], 1
    %21 = vsyncpa %s20, 0
    loop: start=0, step=1, limit=4
    $region2: #{tpu_custom_call.1} parent=1 // loop_pre_header
      _
    $region3: #{tpu_custom_call.1} parent=1 // loop_header
      %s23 = sphi 0, %s27
      %p24 = scmp.ge.s32.totalorder %s23, 4
      %s30 = sphi 0, %s42
      %s31 = sphi 0, %s38
      %s32 = sphi 0, %s30
      %s33 = sphi 0, %s31
      %s34 = sphi 0, %s32
      %s35 = sphi 0, %s33
      %s47 = sphi 0, %s49
      %s50 = sphi 0, %s47
      %s51 = sphi 0, %s50
      %s67 = sphi 0, %s51
      %s71 = sphi 0, %s71
      %s73 = sphi 0, %s71
      %s74 = sphi 0, %s73
      %s88 = sphi 0, %s74
      %s92 = sphi 0, %s92
      %s94 = sphi 0, %s92
      %s95 = sphi 0, %s94
      %s109 = sphi 0, %s95
      %s113 = sphi 0, %s113
      %s115 = sphi 0, %s113
      %s116 = sphi 0, %s115
      %s130 = sphi 0, %s116
      %s134 = sphi 0, %s134
      %s136 = sphi 0, %s134
      %s137 = sphi 0, %s136
      %s151 = sphi 0, %s137
      %s159 = sphi 0, %s161
      %s162 = sphi 0, %s159
      %s163 = sphi 0, %s162
      %s179 = sphi 0, %s163
      %s187 = sphi 0, %s189
      %s190 = sphi 0, %s187
      %s191 = sphi 0, %s190
      %s207 = sphi 0, %s191
    $region4: #{tpu_custom_call.1} parent=1 // loop_header_branch
      %26 = sbr.rel (%p24) target = $region8
    $region5: #{tpu_custom_call.1} parent=1 // loop_body
      %s28 = ssub.s32 %s23, 1
      %s29 = ssub.s32 %s23, 2
      %s36 = sadd.s32 1, %s31
      %p37 = scmp.ge.s32.totalorder %s36, 1
      %s38 = scalar_select %p37, 0, %s36
      %s39 = sadd.s32 1, %s30
      %s40 = scalar_select %p37, %s39, %s30
      %p41 = scmp.ge.s32.totalorder %s40, 2
      %s42 = scalar_select %p41, 0, %s40
      %s43 = ssub.s32 %s30, %s42
      %s44 = ssub.s32 %s31, %s38
      %s45 = sor.u32 %s43, %s44
      %p46 = scmp.eq.s32.totalorder %s45, 0
      %s48 = sadd.s32 %s47, 1
      %s49 = scalar_select %p46, %s47, %s48
      %p52 = pneg %p46
      %p53 = scmp.eq.s32.totalorder %s23, 1
      %p54 = por %p52, %p53
      %p55 = scmp.ne.s32.totalorder %s47, %s50
      %p56 = scmp.eq.s32.totalorder %s23, 0
      %p57 = por %p55, %p56
      %p58 = scmp.ne.s32.totalorder %s47, %s50
      %p59 = scmp.eq.s32.totalorder %s28, 1
      %p60 = por %p58, %p59
      %p61 = scmp.ne.s32.totalorder %s50, %s51
      %p62 = scmp.eq.s32.totalorder %s28, 0
      %p63 = por %p61, %p62
      %p64 = scmp.ne.s32.totalorder %s50, %s51
      %p65 = scmp.eq.s32.totalorder %s29, 1
      %p66 = por %p64, %p65
      %p68 = scmp.ne.s32.totalorder %s51, %s67
      %p69 = scmp.eq.s32.totalorder %s29, 0
      %p70 = por %p68, %p69
      %s72 = sadd.s32 %s71, 1
      %p75 = scmp.eq.s32.totalorder %s23, 1
      %p76 = scmp.ne.s32.totalorder %s71, %s73
      %p77 = scmp.eq.s32.totalorder %s23, 0
      %p78 = por %p76, %p77
      %p79 = scmp.ne.s32.totalorder %s71, %s73
      %p80 = scmp.eq.s32.totalorder %s28, 1
      %p81 = por %p79, %p80
      %p82 = scmp.ne.s32.totalorder %s73, %s74
      %p83 = scmp.eq.s32.totalorder %s28, 0
      %p84 = por %p82, %p83
      %p85 = scmp.ne.s32.totalorder %s73, %s74
      %p86 = scmp.eq.s32.totalorder %s29, 1
      %p87 = por %p85, %p86
      %p89 = scmp.ne.s32.totalorder %s74, %s88
      %p90 = scmp.eq.s32.totalorder %s29, 0
      %p91 = por %p89, %p90
      %s93 = sadd.s32 %s92, 1
      %p96 = scmp.eq.s32.totalorder %s23, 1
      %p97 = scmp.ne.s32.totalorder %s92, %s94
      %p98 = scmp.eq.s32.totalorder %s23, 0
      %p99 = por %p97, %p98
      %p100 = scmp.ne.s32.totalorder %s92, %s94
      %p101 = scmp.eq.s32.totalorder %s28, 1
      %p102 = por %p100, %p101
      %p103 = scmp.ne.s32.totalorder %s94, %s95
      %p104 = scmp.eq.s32.totalorder %s28, 0
      %p105 = por %p103, %p104
      %p106 = scmp.ne.s32.totalorder %s94, %s95
      %p107 = scmp.eq.s32.totalorder %s29, 1
      %p108 = por %p106, %p107
      %p110 = scmp.ne.s32.totalorder %s95, %s109
      %p111 = scmp.eq.s32.totalorder %s29, 0
      %p112 = por %p110, %p111
      %s114 = sadd.s32 %s113, 1
      %p117 = scmp.eq.s32.totalorder %s23, 1
      %p118 = scmp.ne.s32.totalorder %s113, %s115
      %p119 = scmp.eq.s32.totalorder %s23, 0
      %p120 = por %p118, %p119
      %p121 = scmp.ne.s32.totalorder %s113, %s115
      %p122 = scmp.eq.s32.totalorder %s28, 1
      %p123 = por %p121, %p122
      %p124 = scmp.ne.s32.totalorder %s115, %s116
      %p125 = scmp.eq.s32.totalorder %s28, 0
      %p126 = por %p124, %p125
      %p127 = scmp.ne.s32.totalorder %s115, %s116
      %p128 = scmp.eq.s32.totalorder %s29, 1
      %p129 = por %p127, %p128
      %p131 = scmp.ne.s32.totalorder %s116, %s130
      %p132 = scmp.eq.s32.totalorder %s29, 0
      %p133 = por %p131, %p132
      %s135 = sadd.s32 %s134, 1
      %p138 = scmp.eq.s32.totalorder %s23, 1
      %p139 = scmp.ne.s32.totalorder %s134, %s136
      %p140 = scmp.eq.s32.totalorder %s23, 0
      %p141 = por %p139, %p140
      %p142 = scmp.ne.s32.totalorder %s134, %s136
      %p143 = scmp.eq.s32.totalorder %s28, 1
      %p144 = por %p142, %p143
      %p145 = scmp.ne.s32.totalorder %s136, %s137
      %p146 = scmp.eq.s32.totalorder %s28, 0
      %p147 = por %p145, %p146
      %p148 = scmp.ne.s32.totalorder %s136, %s137
      %p149 = scmp.eq.s32.totalorder %s29, 1
      %p150 = por %p148, %p149
      %p152 = scmp.ne.s32.totalorder %s137, %s151
      %p153 = scmp.eq.s32.totalorder %s29, 0
      %p154 = por %p152, %p153
      %s155 = ssub.s32 %s30, %s42
      %s156 = ssub.s32 %s31, %s38
      %s157 = sor.u32 %s155, %s156
      %p158 = scmp.eq.s32.totalorder %s157, 0
      %s160 = sadd.s32 %s159, 1
      %s161 = scalar_select %p158, %s159, %s160
      %p164 = pneg %p158
      %p165 = scmp.eq.s32.totalorder %s23, 1
      %p166 = por %p164, %p165
      %p167 = scmp.ne.s32.totalorder %s159, %s162
      %p168 = scmp.eq.s32.totalorder %s23, 0
      %p169 = por %p167, %p168
      %p170 = scmp.ne.s32.totalorder %s159, %s162
      %p171 = scmp.eq.s32.totalorder %s28, 1
      %p172 = por %p170, %p171
      %p173 = scmp.ne.s32.totalorder %s162, %s163
      %p174 = scmp.eq.s32.totalorder %s28, 0
      %p175 = por %p173, %p174
      %p176 = scmp.ne.s32.totalorder %s162, %s163
      %p177 = scmp.eq.s32.totalorder %s29, 1
      %p178 = por %p176, %p177
      %p180 = scmp.ne.s32.totalorder %s163, %s179
      %p181 = scmp.eq.s32.totalorder %s29, 0
      %p182 = por %p180, %p181
      %s183 = ssub.s32 %s30, %s42
      %s184 = ssub.s32 %s31, %s38
      %s185 = sor.u32 %s183, %s184
      %p186 = scmp.eq.s32.totalorder %s185, 0
      %s188 = sadd.s32 %s187, 1
      %s189 = scalar_select %p186, %s187, %s188
      %p192 = pneg %p186
      %p193 = scmp.eq.s32.totalorder %s23, 1
      %p194 = por %p192, %p193
      %p195 = scmp.ne.s32.totalorder %s187, %s190
      %p196 = scmp.eq.s32.totalorder %s23, 0
      %p197 = por %p195, %p196
      %p198 = scmp.ne.s32.totalorder %s187, %s190
      %p199 = scmp.eq.s32.totalorder %s28, 1
      %p200 = por %p198, %p199
      %p201 = scmp.ne.s32.totalorder %s190, %s191
      %p202 = scmp.eq.s32.totalorder %s28, 0
      %p203 = por %p201, %p202
      %p204 = scmp.ne.s32.totalorder %s190, %s191
      %p205 = scmp.eq.s32.totalorder %s29, 1
      %p206 = por %p204, %p205
      %p208 = scmp.ne.s32.totalorder %s191, %s207
      %p209 = scmp.eq.s32.totalorder %s29, 0
      %p210 = por %p208, %p209
      %p211 = scmp.le.s32.totalorder 1, %s23
      %p212 = scmp.lt.s32.totalorder %s23, 3
      %p213 = pnand %p211, %p212
      %p214 = pneg %p213
      // Predicated region
      $region9: #{tpu_custom_call.1} parent=5 // pred_check
        _
      $region10: #{tpu_custom_call.1} parent=5 // pred_check_branch
        %216 = sbr.rel (%p213) target = $region12
      $region11: #{tpu_custom_call.1} parent=5 // pred_region
        %s217 = ssub.s32 %s23, 1
        // Predicated region
        $region13: #{tpu_custom_call.1} parent=11 // pred_check
          %p218 = pneg %p84
        $region14: #{tpu_custom_call.1} parent=11 // pred_check_branch
          %220 = sbr.rel (%p218) target = $region16
        $region15: #{tpu_custom_call.1} parent=11 // pred_region
          _
        $region16: #{tpu_custom_call.1} parent=11 // pred_fallthru
          _
        // Predicated region
        $region17: #{tpu_custom_call.1} parent=11 // pred_check
          %p221 = pneg %p105
        $region18: #{tpu_custom_call.1} parent=11 // pred_check_branch
          %223 = sbr.rel (%p221) target = $region20
        $region19: #{tpu_custom_call.1} parent=11 // pred_region
          _
        $region20: #{tpu_custom_call.1} parent=11 // pred_fallthru
          _
        // Predicated region
        $region21: #{tpu_custom_call.1} parent=11 // pred_check
          %p224 = pneg %p126
        $region22: #{tpu_custom_call.1} parent=11 // pred_check_branch
          %226 = sbr.rel (%p224) target = $region24
        $region23: #{tpu_custom_call.1} parent=11 // pred_region
          %s228 = ssub.s32 3072, 3072
          %229 = vsyncadd [#allocation6], %s228
          %s230 = sshll.u32 [#allocation5], 4
          %s231 = int_to_ptr.vmem [resolvable:$true] %s230
          %236 = dma.hbm_to_vmem [thread:$0]  %s3, 3072, %s231, [#allocation6], 192, 192, 12
        $region24: #{tpu_custom_call.1} parent=11 // pred_fallthru
          _
        // Predicated region
        $region25: #{tpu_custom_call.1} parent=11 // pred_check
          %p237 = pneg %p147
        $region26: #{tpu_custom_call.1} parent=11 // pred_check_branch
          %239 = sbr.rel (%p237) target = $region28
        $region27: #{tpu_custom_call.1} parent=11 // pred_region
          _
        $region28: #{tpu_custom_call.1} parent=11 // pred_fallthru
          _
      $region12: #{tpu_custom_call.1} parent=5 // pred_fallthru
        _
      %p240 = scmp.lt.s32.totalorder %s23, 2
      // Predicated region
      $region29: #{tpu_custom_call.1} parent=5 // pred_check
        %p241 = pneg %p240
      $region30: #{tpu_custom_call.1} parent=5 // pred_check_branch
        %243 = sbr.rel (%p241) target = $region32
      $region31: #{tpu_custom_call.1} parent=5 // pred_region
        // Predicated region
        $region33: #{tpu_custom_call.1} parent=31 // pred_check
          %p244 = pneg %p57
        $region34: #{tpu_custom_call.1} parent=31 // pred_check_branch
          %246 = sbr.rel (%p244) target = $region36
        $region35: #{tpu_custom_call.1} parent=31 // pred_region
          %s247 = sand.u32 %s47, 1
          %s248 = scalar_lea.sflag [#allocation3], %s247
          %s249 = sand.u32 %s47, 1
          %s250 = smul.addr %s249, 16
          %s251 = scalar_lea.vmem [#allocation2], %s250
          %s252 = smul.u32 2, %s31
          %s254 = ssub.s32 256, 256
          %255 = vsyncadd %s248, %s254
          %s256 = smul.addr %s30, 2
          %s257 = sadd.s32 %s252, %s256
          %s258 = smul.addr %s257, 128
          %s259 = scalar_lea.hbm %s0, %s258
          %s260 = sshll.u32 %s251, 4
          %s261 = int_to_ptr.vmem [resolvable:$true] %s260
          %266 = dma.hbm_to_vmem [thread:$0]  %s259, 256, %s261, %s248, 128, 128, 8
        $region36: #{tpu_custom_call.1} parent=31 // pred_fallthru
          _
      $region32: #{tpu_custom_call.1} parent=5 // pred_fallthru
        _
      %p267 = scmp.le.s32.totalorder 1, %s23
      %p268 = scmp.lt.s32.totalorder %s23, 3
      %p269 = pnand %p267, %p268
      %p270 = pneg %p269
      // Predicated region
      $region37: #{tpu_custom_call.1} parent=5 // pred_check
        _
      $region38: #{tpu_custom_call.1} parent=5 // pred_check_branch
        %272 = sbr.rel (%p269) target = $region40
      $region39: #{tpu_custom_call.1} parent=5 // pred_region
        %s273 = ssub.s32 %s23, 1
        %s274 = sand.u32 %s50, 1
        %s275 = scalar_lea.sflag [#allocation3], %s274
        %s276 = sand.u32 %s50, 1
        %s277 = smul.addr %s276, 16
        %s278 = scalar_lea.vmem [#allocation2], %s277
        // Predicated region
        $region41: #{tpu_custom_call.1} parent=39 // pred_check
          %p279 = pneg %p63
        $region42: #{tpu_custom_call.1} parent=39 // pred_check_branch
          %281 = sbr.rel (%p279) target = $region44
        $region43: #{tpu_custom_call.1} parent=39 // pred_region
          %282 = dma.done %s275, 256
        $region44: #{tpu_custom_call.1} parent=39 // pred_fallthru
          _
        // Predicated region
        $region45: #{tpu_custom_call.1} parent=39 // pred_check
          %p283 = pneg %p126
        $region46: #{tpu_custom_call.1} parent=39 // pred_check_branch
          %285 = sbr.rel (%p283) target = $region48
        $region47: #{tpu_custom_call.1} parent=39 // pred_region
          %286 = dma.done [#allocation6], 3072
        $region48: #{tpu_custom_call.1} parent=39 // pred_fallthru
          _
        %s287 = sand.u32 %s50, 1
        %s288 = scalar_lea.sflag [#allocation3], %s287
        %s289 = sand.u32 %s50, 1
        %s290 = smul.addr %s289, 16
        %s291 = scalar_lea.vmem [#allocation2], %s290
        %p292 = pneg %p63
        %p293 = pneg %p60
        %p294 = pneg %p84
        %p295 = pneg %p81
        %p296 = pneg %p105
        %p297 = pneg %p102
        %p298 = pneg %p126
        %p299 = pneg %p123
        %p300 = pneg %p147
        %p301 = pneg %p144
        %p302 = pneg %p175
        %p303 = pneg %p172
        %s304 = sand.u32 %s162, 1
        %s305 = scalar_lea.sflag [#allocation4], %s304
        %s306 = sand.u32 %s162, 1
        %s307 = smul.addr %s306, 8
        %s308 = scalar_lea.vmem [#allocation7], %s307
        %p309 = pneg %p203
        %p310 = pneg %p200
        %s311 = sand.u32 %s190, 1
        %s312 = scalar_lea.sflag [#allocation9], %s311
        %s313 = sand.u32 %s190, 1
        %s314 = smul.addr %s313, 16
        %s315 = scalar_lea.vmem [#allocation8], %s314
        %s316 = smul.u32 2, %s33
        %s317 = smul.u32 2, %s33
        %s318 = smul.u32 2, %s33
        %v320 = vld [vmem:[%s278] sm:$0xff]
        %v321 = vld [vmem:[%s278 + $0x8] sm:$0xff]
        %v322 = vld [vmem:[%s1] sm:$0x1]
        %v323 = vld [vmem:[%s2] sm:$0x1]
        %324 = vadd.xlane.f32.xlu0 %v320
        %v325 = vpop.xlane.xlu0 %324
        %326 = vadd.xlane.f32.xlu0 %v321
        %v327 = vpop.xlane.xlu0 %326
        %v328 = vrcp.pop 128.0
        %v329 = vmul.f32 %v325, %v328
        %v330 = vmul.f32 %v327, %v328
        %v331 = vsub.f32 %v320, %v329
        %v332 = vsub.f32 %v321, %v330
        %v333 = vmul.f32 %v331, %v331
        %v334 = vmul.f32 %v332, %v332
        %335 = vadd.xlane.f32.xlu0 %v333
        %v336 = vpop.xlane.xlu0 %335
        %337 = vadd.xlane.f32.xlu0 %v334
        %v338 = vpop.xlane.xlu0 %337
        %v339 = vmul.f32 %v336, %v328
        %v340 = vmul.f32 %v338, %v328
        %v341 = vadd.f32 %v339, 1e-08
        %v342 = vadd.f32 %v340, 1e-08
        %v343 = vrsqrt.pop %v341
        %v344 = vrsqrt.pop %v342
        %v345 = vmul.f32 %v331, %v343
        %v346 = vmul.f32 %v332, %v344
        %v348 = vlaneseq
        %v349 = vshrl.u32 %v348, 7
        %v350 = vsub.s32 0, %v349
        %v351 = vrot.slane %v322, %v350
        %v353 = vmul.f32 %v351, %v345
        %v354 = vmul.f32 %v351, %v346
        %v356 = vlaneseq
        %v357 = vshrl.u32 %v356, 7
        %v358 = vsub.s32 0, %v357
        %v359 = vrot.slane %v323, %v358
        %v361 = vadd.f32 %v353, %v359
        %v362 = vadd.f32 %v354, %v359
        %v363 = vld [vmem:[#allocation5] sm:$0xff]
        %v364 = vld [vmem:[#allocation5 + $0x8] sm:$0xf]
        %v365 = vld [vmem:[#allocation5 + $0xc] sm:$0xff]
        %v366 = vld [vmem:[#allocation5 + $0x14] sm:$0xf]
        %v367 = vld [vmem:[#allocation5 + $0x18] sm:$0xff]
        %v368 = vld [vmem:[#allocation5 + $0x20] sm:$0xf]
        %v369 = vld [vmem:[#allocation5 + $0x24] sm:$0xff]
        %v370 = vld [vmem:[#allocation5 + $0x2c] sm:$0xf]
        %v371 = vld [vmem:[#allocation5 + $0x30] sm:$0xff]
        %v372 = vld [vmem:[#allocation5 + $0x38] sm:$0xf]
        %v373 = vld [vmem:[#allocation5 + $0x3c] sm:$0xff]
        %v374 = vld [vmem:[#allocation5 + $0x44] sm:$0xf]
        %v375 = vld [vmem:[#allocation5 + $0x48] sm:$0xff]
        %v376 = vld [vmem:[#allocation5 + $0x50] sm:$0xf]
        %v377 = vld [vmem:[#allocation5 + $0x54] sm:$0xff]
        %v378 = vld [vmem:[#allocation5 + $0x5c] sm:$0xf]
        %v379 = vld [vmem:[#allocation5 + $0x60] sm:$0xff]
        %v380 = vld [vmem:[#allocation5 + $0x68] sm:$0xf]
        %v381 = vld [vmem:[#allocation5 + $0x6c] sm:$0xff]
        %v382 = vld [vmem:[#allocation5 + $0x74] sm:$0xf]
        %v383 = vld [vmem:[#allocation5 + $0x78] sm:$0xff]
        %v384 = vld [vmem:[#allocation5 + $0x80] sm:$0xf]
        %v385 = vld [vmem:[#allocation5 + $0x84] sm:$0xff]
        %v386 = vld [vmem:[#allocation5 + $0x8c] sm:$0xf]
        %v387 = vld [vmem:[#allocation5 + $0x90] sm:$0xff]
        %v388 = vld [vmem:[#allocation5 + $0x98] sm:$0xf]
        %v389 = vld [vmem:[#allocation5 + $0x9c] sm:$0xff]
        %v390 = vld [vmem:[#allocation5 + $0xa4] sm:$0xf]
        %v391 = vld [vmem:[#allocation5 + $0xa8] sm:$0xff]
        %v392 = vld [vmem:[#allocation5 + $0xb0] sm:$0xf]
        %v393 = vld [vmem:[#allocation5 + $0xb4] sm:$0xff]
        %v394 = vld [vmem:[#allocation5 + $0xbc] sm:$0xf]
        %v395 = vpack.c.bf16 %v362, %v361
        %v396 = vld [vmem:[%s4] sm:$0x7]
        %v398 = vlaneseq
        %v399 = vshrl.u32 %v398, 7
        %v400 = vsub.s32 0, %v399
        %v401 = vrot.slane %v396, %v400
        %v402 = vlaneseq
        %v403 = vshrl.u32 %v402, 7
        %v404 = vsub.s32 1, %v403
        %v405 = vrot.slane %v396, %v404
        %v406 = vlaneseq
        %v407 = vshrl.u32 %v406, 7
        %v408 = vsub.s32 2, %v407
        %v409 = vrot.slane %v396, %v408
        %v445 = vunpack.c.l.b16 %v363
        %v446 = vunpack.c.h.b16 %v363
        %v447 = vunpack.c.l.b16 %v364
        %v448 = vunpack.c.l.b16 %v365
        %v449 = vunpack.c.h.b16 %v365
        %v450 = vunpack.c.l.b16 %v366
        %v451 = vunpack.c.l.b16 %v367
        %v452 = vunpack.c.h.b16 %v367
        %v453 = vunpack.c.l.b16 %v368
        %v454 = vunpack.c.l.b16 %v369
        %v455 = vunpack.c.h.b16 %v369
        %v456 = vunpack.c.l.b16 %v370
        %v457 = vunpack.c.l.b16 %v371
        %v458 = vunpack.c.h.b16 %v371
        %v459 = vunpack.c.l.b16 %v372
        %v460 = vunpack.c.l.b16 %v373
        %v461 = vunpack.c.h.b16 %v373
        %v462 = vunpack.c.l.b16 %v374
        %v463 = vunpack.c.l.b16 %v375
        %v464 = vunpack.c.h.b16 %v375
        %v465 = vunpack.c.l.b16 %v376
        %v466 = vunpack.c.l.b16 %v377
        %v467 = vunpack.c.h.b16 %v377
        %v468 = vunpack.c.l.b16 %v378
        %v469 = vunpack.c.l.b16 %v379
        %v470 = vunpack.c.h.b16 %v379
        %v471 = vunpack.c.l.b16 %v380
        %v472 = vunpack.c.l.b16 %v381
        %v473 = vunpack.c.h.b16 %v381
        %v474 = vunpack.c.l.b16 %v382
        %v475 = vunpack.c.l.b16 %v383
        %v476 = vunpack.c.h.b16 %v383
        %v477 = vunpack.c.l.b16 %v384
        %v478 = vunpack.c.l.b16 %v385
        %v479 = vunpack.c.h.b16 %v385
        %v480 = vunpack.c.l.b16 %v386
        %v481 = vunpack.c.l.b16 %v387
        %v482 = vunpack.c.h.b16 %v387
        %v483 = vunpack.c.l.b16 %v388
        %v484 = vunpack.c.l.b16 %v389
        %v485 = vunpack.c.h.b16 %v389
        %v486 = vunpack.c.l.b16 %v390
        %v487 = vunpack.c.l.b16 %v391
        %v488 = vunpack.c.h.b16 %v391
        %v489 = vunpack.c.l.b16 %v392
        %v490 = vunpack.c.l.b16 %v393
        %v491 = vunpack.c.h.b16 %v393
        %v492 = vunpack.c.l.b16 %v394
        %v493 = vpack.c.b16 %v448, %v445
        %v494 = vpack.c.b16 %v449, %v446
        %v495 = vpack.c.b16 %v450, %v447
        %v496 = vpack.c.b16 %v454, %v451
        %v497 = vpack.c.b16 %v455, %v452
        %v498 = vpack.c.b16 %v456, %v453
        %v499 = vpack.c.b16 %v460, %v457
        %v500 = vpack.c.b16 %v461, %v458
        %v501 = vpack.c.b16 %v462, %v459
        %v502 = vpack.c.b16 %v466, %v463
        %v503 = vpack.c.b16 %v467, %v464
        %v504 = vpack.c.b16 %v468, %v465
        %v505 = vpack.c.b16 %v472, %v469
        %v506 = vpack.c.b16 %v473, %v470
        %v507 = vpack.c.b16 %v474, %v471
        %v508 = vpack.c.b16 %v478, %v475
        %v509 = vpack.c.b16 %v479, %v476
        %v510 = vpack.c.b16 %v480, %v477
        %v511 = vpack.c.b16 %v484, %v481
        %v512 = vpack.c.b16 %v485, %v482
        %v513 = vpack.c.b16 %v486, %v483
        %v514 = vpack.c.b16 %v490, %v487
        %v515 = vpack.c.b16 %v491, %v488
        %v516 = vpack.c.b16 %v492, %v489
        %541 = vmatprep.subr.bf16.mxu0 %v494
        %542 = vmatpush1.bf16.msra.mxu0 %v493
        %543 = vmatprep.subr.bf16.mxu0 %v497
        %544 = vmatpush1.bf16.msra.mxu0 %v496
        %545 = vmatprep.subr.bf16.mxu0 %v500
        %546 = vmatpush1.bf16.msra.mxu0 %v499
        %547 = vmatprep.subr.bf16.mxu0 %v503
        %548 = vmatpush1.bf16.msra.mxu0 %v502
        %549 = vmatprep.subr.bf16.mxu0 %v506
        %550 = vmatpush1.bf16.msra.mxu0 %v505
        %551 = vmatprep.subr.bf16.mxu0 %v509
        %552 = vmatpush1.bf16.msra.mxu0 %v508
        %553 = vmatprep.subr.bf16.mxu0 %v512
        %554 = vmatpush1.bf16.msra.mxu0 %v511
        %555 = vmatprep.subr.bf16.mxu0 %v515
        %556 = vmatpush1.bf16.msra.mxu0 %v514
        %557 = vmatprep.subr.bf16.mxu0 0
        %558 = vmatpush1.bf16.msra.mxu0 0
        %559 = vmatprep.subr.bf16.mxu0 0
        %560 = vmatpush1.bf16.msra.mxu0 0
        %561 = vmatprep.subr.bf16.mxu0 0
        %562 = vmatpush1.bf16.msra.mxu0 0
        %563 = vmatprep.subr.bf16.mxu0 0
        %564 = vmatpush1.bf16.msra.mxu0 0
        %565 = vmatprep.subr.bf16.mxu0 0
        %566 = vmatpush1.bf16.msra.mxu0 0
        %567 = vmatprep.subr.bf16.mxu0 0
        %568 = vmatpush1.bf16.msra.mxu0 0
        %569 = vmatprep.subr.bf16.mxu0 0
        %570 = vmatpush1.bf16.msra.mxu0 0
        %571 = vmatprep.subr.bf16.mxu0 0
        %572 = vmatpush1.bf16.msra.mxu0 0
        %573 = vmatprep.mubr.bf16.mxu0 0
        %574 = vmatmul.mubr.bf16.gmra.mrb[0].mxu0 %v395
        %v575 = vpop.f32.mrb[0].mxu0
        %v576 = vadd.f32 %v401, %v575
        %v577 = vpop.f32.mrb[0].mxu0
        %v578 = vadd.f32 %v405, %v577
        %v579 = vpop.f32.mrb[0].mxu0
        %v580 = vadd.f32 %v401, %v579
        %v581 = vpop.f32.mrb[0].mxu0
        %v582 = vadd.f32 %v405, %v581
        %583 = vdwg.mxu0
        %584 = vmatprep.subr.bf16.mxu0 0
        %585 = vmatpush1.bf16.msra.mxu0 %v495
        %586 = vmatprep.subr.bf16.mxu0 0
        %587 = vmatpush1.bf16.msra.mxu0 %v498
        %588 = vmatprep.subr.bf16.mxu0 0
        %589 = vmatpush1.bf16.msra.mxu0 %v501
        %590 = vmatprep.subr.bf16.mxu0 0
        %591 = vmatpush1.bf16.msra.mxu0 %v504
        %592 = vmatprep.subr.bf16.mxu0 0
        %593 = vmatpush1.bf16.msra.mxu0 %v507
        %594 = vmatprep.subr.bf16.mxu0 0
        %595 = vmatpush1.bf16.msra.mxu0 %v510
        %596 = vmatprep.subr.bf16.mxu0 0
        %597 = vmatpush1.bf16.msra.mxu0 %v513
        %598 = vmatprep.subr.bf16.mxu0 0
        %599 = vmatpush1.bf16.msra.mxu0 %v516
        %600 = vmatprep.subr.bf16.mxu0 0
        %601 = vmatpush1.bf16.msra.mxu0 0
        %602 = vmatprep.subr.bf16.mxu0 0
        %603 = vmatpush1.bf16.msra.mxu0 0
        %604 = vmatprep.subr.bf16.mxu0 0
        %605 = vmatpush1.bf16.msra.mxu0 0
        %606 = vmatprep.subr.bf16.mxu0 0
        %607 = vmatpush1.bf16.msra.mxu0 0
        %608 = vmatprep.subr.bf16.mxu0 0
        %609 = vmatpush1.bf16.msra.mxu0 0
        %610 = vmatprep.subr.bf16.mxu0 0
        %611 = vmatpush1.bf16.msra.mxu0 0
        %612 = vmatprep.subr.bf16.mxu0 0
        %613 = vmatpush1.bf16.msra.mxu0 0
        %614 = vmatprep.subr.bf16.mxu0 0
        %615 = vmatpush1.bf16.msra.mxu0 0
        %616 = vmatprep.mubr.bf16.mxu0 0
        %617 = vmatmul.mubr.bf16.gmra.mrb[0].mxu0 %v395
        %v618 = vpop.f32.mrb[0].mxu0
        %v619 = vadd.f32 %v409, %v618
        %v620 = vpop.f32.mrb[0].mxu0
        %v621 = vpop.f32.mrb[0].mxu0
        %v622 = vadd.f32 %v409, %v621
        %v623 = vpop.f32.mrb[0].mxu0
        %624 = vdwg.mxu0
        %v625 = vpack.c.bf16 %v580, %v576
        %v627 = vunpack.c.l.b16 %v625
        %v628 = vunpack.c.h.b16 %v625
        %v629 = vpack.c.b16 %v627, %v627
        %v630 = vpack.c.b16 %v628, %v628
        %633 = vst [vmem:[%s308] sm:$0xf] %v629
        %634 = vst [vmem:[%s308 + $0x4] sm:$0xf] %v630
        %v635 = vpack.c.bf16 %v582, %v578
        %v636 = vpack.c.bf16 %v622, %v619
        %v639 = vunpack.c.l.b16 %v635
        %v640 = vunpack.c.l.b16 %v636
        %v641 = vunpack.c.h.b16 %v635
        %v642 = vunpack.c.h.b16 %v636
        %v643 = vpack.c.b16 %v640, %v639
        %v644 = vpack.c.b16 %v642, %v641
        %647 = vst [vmem:[%s315] sm:$0xff] %v643
        %648 = vst [vmem:[%s315 + $0x8] sm:$0xff] %v644
        %s649 = sand.u32 %s162, 1
        %s650 = scalar_lea.sflag [#allocation4], %s649
        %s651 = sand.u32 %s162, 1
        %s652 = smul.addr %s651, 8
        %s653 = scalar_lea.vmem [#allocation7], %s652
        %s654 = sand.u32 %s190, 1
        %s655 = scalar_lea.sflag [#allocation9], %s654
        %s656 = sand.u32 %s190, 1
        %s657 = smul.addr %s656, 16
        %s658 = scalar_lea.vmem [#allocation8], %s657
        // Predicated region
        $region49: #{tpu_custom_call.1} parent=39 // pred_check
          %p659 = pneg %p172
        $region50: #{tpu_custom_call.1} parent=39 // pred_check_branch
          %661 = sbr.rel (%p659) target = $region52
        $region51: #{tpu_custom_call.1} parent=39 // pred_region
          %s662 = smul.u32 2, %s33
          %s664 = ssub.s32 128, 128
          %665 = vsyncadd %s650, %s664
          %s666 = smul.addr %s32, 2
          %s667 = sadd.s32 %s662, %s666
          %s668 = smul.addr %s667, 64
          %s669 = scalar_lea.hbm %s5, %s668
          %s670 = sshll.u32 %s653, 4
          %s671 = int_to_ptr.vmem [resolvable:$true] %s670
          %676 = dma.vmem_to_hbm [thread:$0]  %s671, 128, %s669, %s650, 64, 64, 4
        $region52: #{tpu_custom_call.1} parent=39 // pred_fallthru
          _
        // Predicated region
        $region53: #{tpu_custom_call.1} parent=39 // pred_check
          %p677 = pneg %p200
        $region54: #{tpu_custom_call.1} parent=39 // pred_check_branch
          %679 = sbr.rel (%p677) target = $region56
        $region55: #{tpu_custom_call.1} parent=39 // pred_region
          %s680 = smul.u32 2, %s33
          %s682 = ssub.s32 256, 256
          %683 = vsyncadd %s655, %s682
          %s684 = smul.addr %s680, 2
          %s685 = smul.addr %s32, 4
          %s686 = sadd.s32 %s684, %s685
          %s687 = smul.addr %s686, 64
          %s688 = scalar_lea.hbm %s6, %s687
          %s689 = sshll.u32 %s658, 4
          %s690 = int_to_ptr.vmem [resolvable:$true] %s689
          %695 = dma.vmem_to_hbm [thread:$0]  %s690, 256, %s688, %s655, 128, 128, 8
        $region56: #{tpu_custom_call.1} parent=39 // pred_fallthru
          _
      $region40: #{tpu_custom_call.1} parent=5 // pred_fallthru
        _
      %p696 = scmp.le.s32.totalorder 2, %s23
      // Predicated region
      $region57: #{tpu_custom_call.1} parent=5 // pred_check
        %p697 = pneg %p696
      $region58: #{tpu_custom_call.1} parent=5 // pred_check_branch
        %699 = sbr.rel (%p697) target = $region60
      $region59: #{tpu_custom_call.1} parent=5 // pred_region
        %s700 = ssub.s32 %s23, 2
        // Predicated region
        $region61: #{tpu_custom_call.1} parent=59 // pred_check
          %p701 = pneg %p178
        $region62: #{tpu_custom_call.1} parent=59 // pred_check_branch
          %703 = sbr.rel (%p701) target = $region64
        $region63: #{tpu_custom_call.1} parent=59 // pred_region
          %s704 = sand.u32 %s163, 1
          %s705 = scalar_lea.sflag [#allocation4], %s704
          %s706 = sand.u32 %s163, 1
          %s707 = smul.addr %s706, 8
          %s708 = scalar_lea.vmem [#allocation7], %s707
          %709 = dma.done %s705, 128
        $region64: #{tpu_custom_call.1} parent=59 // pred_fallthru
          _
        // Predicated region
        $region65: #{tpu_custom_call.1} parent=59 // pred_check
          %p710 = pneg %p206
        $region66: #{tpu_custom_call.1} parent=59 // pred_check_branch
          %712 = sbr.rel (%p710) target = $region68
        $region67: #{tpu_custom_call.1} parent=59 // pred_region
          %s713 = sand.u32 %s191, 1
          %s714 = scalar_lea.sflag [#allocation9], %s713
          %s715 = sand.u32 %s191, 1
          %s716 = smul.addr %s715, 16
          %s717 = scalar_lea.vmem [#allocation8], %s716
          %718 = dma.done %s714, 256
        $region68: #{tpu_custom_call.1} parent=59 // pred_fallthru
          _
      $region60: #{tpu_custom_call.1} parent=5 // pred_fallthru
        _
    $region6: #{tpu_custom_call.1} parent=1 // loop_footer
      %s27 = sadd.s32 1, %s23
    $region7: #{tpu_custom_call.1} parent=1 // loop_footer_branch
      %22 = sbr.rel target = $region3
    $region8: #{tpu_custom_call.1} parent=1 // loop_exit
      _
    %719 = vsyncpa [#allocation3], 1
    %s720 = scalar_lea.sflag [#allocation3], 1
    %721 = vsyncpa %s720, 1
    %722 = vsyncpa [#allocation6], 1
    %723 = vsyncpa [#allocation4], 1
    %s724 = scalar_lea.sflag [#allocation4], 1
    %725 = vsyncpa %s724, 1
    %726 = vsyncpa [#allocation9], 1
    %s727 = scalar_lea.sflag [#allocation9], 1
    %728 = vsyncpa %s727, 1

</llo_original>
